<compile_context>
chip_gen: v7x
topology: tpu7x:2x2x1
jax: 0.10.0
libtpu: 0.0.40
codegen_flags: <defaults>
</compile_context>

<pallas_src>
import functools
import math

import jax
import jax.numpy as jnp
from jax import lax
from jax.experimental import pallas as pl
from jax.experimental.pallas import tpu as pltpu


def _round_up(x, m):
    return (x + m - 1) // m * m


def _lgmixer_kernel(x_ref, w_ref, b_ref, o_ref, *, d_out, approximate_gelu):
    """x: (tm, Dp); w: (Dp, 2*Dp) = [W1 | W2]; b: (1, 2*Dp); o: (tm, Dp)."""
    # Single fused matmul for both branches; MXU accumulates in f32.
    acc = jnp.dot(x_ref[...], w_ref[...], preferred_element_type=jnp.float32)
    acc = acc + b_ref[...].astype(jnp.float32)

    a = acc[:, :d_out]        # conv1 branch (pre-activation), lane-tile aligned
    beta = acc[:, d_out:]     # conv2 branch

    if approximate_gelu:
        # tanh approximation: transcendental goes to the EUP slot.
        alpha = jax.nn.gelu(a, approximate=True)
    else:
        # Exact GELU (erf), matching PyTorch F.gelu default.
        alpha = 0.5 * a * (1.0 + lax.erf(a * (1.0 / math.sqrt(2.0))))

    o_ref[...] = (alpha * beta).astype(o_ref.dtype)


def lgmixer_forward(x, w1, b1, w2, b2, *, row_tile=512, approximate_gelu=False,
                    vmem_limit_bytes=None):
    """x: (B, L, D); w1, w2: (D, D) laid out (D_in, D_out); b1, b2: (D,).

    Returns (B, L, D) = gelu(x @ w1 + b1) * (x @ w2 + b2).
    """
    B, L, D = x.shape
    assert w1.shape == (D, D) and w2.shape == (D, D)
    rows = B * L

    # Lane-dense channel dim (multiple of 128) and row tile (multiple of 8).
    Dp = _round_up(D, 128)
    tm = min(row_tile, _round_up(rows, 8))
    rows_p = _round_up(rows, tm)

    # Flatten and zero-pad rows / channels. Zero-padded input channels
    # contribute nothing to the matmul; padded rows/cols are sliced off after.
    x2 = x.reshape(rows, D)
    x2 = jnp.pad(x2, ((0, rows_p - rows), (0, Dp - D)))

    def _pad_w(w):
        return jnp.pad(w, ((0, Dp - D), (0, Dp - D)))

    # Fuse the two branches: one (Dp, 2*Dp) weight, one (1, 2*Dp) bias.
    w_fused = jnp.concatenate([_pad_w(w1), _pad_w(w2)], axis=1).astype(x.dtype)
    b_fused = jnp.concatenate(
        [jnp.pad(b1, (0, Dp - D)), jnp.pad(b2, (0, Dp - D))]
    ).reshape(1, 2 * Dp).astype(jnp.float32)

    kernel = functools.partial(
        _lgmixer_kernel, d_out=Dp, approximate_gelu=approximate_gelu
    )

    out = pl.pallas_call(
        kernel,
        out_shape=jax.ShapeDtypeStruct((rows_p, Dp), x.dtype),
        grid_spec=pltpu.PrefetchScalarGridSpec(
            num_scalar_prefetch=0,
            grid=(rows_p // tm,),
            in_specs=[
                pl.BlockSpec((tm, Dp), lambda i: (i, 0)),        # x tile (streamed)
                pl.BlockSpec((Dp, 2 * Dp), lambda i: (0, 0)),    # fused W (resident)
                pl.BlockSpec((1, 2 * Dp), lambda i: (0, 0)),     # fused bias (resident)
            ],
            out_specs=pl.BlockSpec((tm, Dp), lambda i: (i, 0)),
        ),
        compiler_params=pltpu.CompilerParams(
            dimension_semantics=("parallel",),
            vmem_limit_bytes=vmem_limit_bytes,
        ),
    )(x2, w_fused, b_fused)

    return out[:rows, :D].reshape(B, L, D)


def init_lgmixer_params(key, d_model, d_ff):
    """Deterministic init mimicking nn.Conv1d defaults (uniform +/- 1/sqrt(fan_in))."""
    k1, k2, k3, k4 = jax.random.split(key, 4)
    bound1 = 1.0 / math.sqrt(d_model)
    bound2 = 1.0 / math.sqrt(d_ff)
    # Conv1d weight is (out, in, 1); we store pre-transposed (in, out) for x @ W.
    w1 = jax.random.uniform(k1, (d_model, d_model), jnp.float32, -bound1, bound1)
    b1 = jax.random.uniform(k2, (d_model,), jnp.float32, -bound1, bound1)
    w2 = jax.random.uniform(k3, (d_ff, d_model), jnp.float32, -bound2, bound2)
    b2 = jax.random.uniform(k4, (d_model,), jnp.float32, -bound2, bound2)
    return w1, b1, w2, b2


if __name__ == "__main__":
    # Small shapes consistent with forward: d_model == d_ff == last dim of attn.
    B, L, D = 2, 8, 32  # d_model = d_ff = 32
    key = jax.random.PRNGKey(0)
    kx, kp = jax.random.split(key)

    x = jax.random.normal(kx, (B, L, D), jnp.float32)
    w1, b1, w2, b2 = init_lgmixer_params(kp, D, D)

    fwd = jax.jit(lgmixer_forward)
    out = fwd(x, w1, b1, w2, b2)
    out = jax.block_until_ready(out)

    # Reference in plain JAX for sanity.
    a = x @ w1 + b1
    alpha_ref = 0.5 * a * (1.0 + lax.erf(a / math.sqrt(2.0)))
    beta_ref = x @ w2 + b2
    ref = alpha_ref * beta_ref
    assert out.shape == (B, L, D)
    assert jnp.allclose(out, ref, atol=1e-5, rtol=1e-5)

    print("KERNEL_OK")
</pallas_src>

<mosaic_0001>
module attributes {stable_mosaic.version = 11 : i64} {
  func.func @_lgmixer_kernel(%arg0: i32, %arg1: memref<16x128xf32, #tpu.memory_space<vmem>>, %arg2: memref<128x256xf32, #tpu.memory_space<vmem>>, %arg3: memref<1x256xf32, #tpu.memory_space<vmem>>, %arg4: memref<16x128xf32, #tpu.memory_space<vmem>>) attributes {dimension_semantics = [#tpu.dimension_semantics<parallel>], iteration_bounds = array<i64: 1>, scalar_prefetch = 0 : i64, scratch_operands = 0 : i64, tpu.core_type = #tpu.core_type<tc>, window_params = [{transform_indices = @transform_0, window_bounds = array<i64: 16, 128>}, {pipeline_mode = #tpu.pipeline_mode<synchronous>, transform_indices = @transform_1, window_bounds = array<i64: 128, 256>}, {pipeline_mode = #tpu.pipeline_mode<synchronous>, transform_indices = @transform_2, window_bounds = array<i64: 1, 256>}, {transform_indices = @transform_3, window_bounds = array<i64: 16, 128>}]} {
    %c0 = arith.constant 0 : index
    %c0_0 = arith.constant 0 : index
    %0 = vector.load %arg1[%c0, %c0_0] : memref<16x128xf32, #tpu.memory_space<vmem>>, vector<16x128xf32>
    %c0_1 = arith.constant 0 : index
    %c0_2 = arith.constant 0 : index
    %1 = vector.load %arg2[%c0_1, %c0_2] : memref<128x256xf32, #tpu.memory_space<vmem>>, vector<128x256xf32>
    %cst = arith.constant dense<0.000000e+00> : vector<16x256xf32>
    %2 = tpu.matmul %0, %1, %cst {dimension_numbers = #tpu.dot_dimension_numbers<[1], [0], [0], [1], [0, 0, 1, 1], [], []>} : vector<16x128xf32>, vector<128x256xf32>, vector<16x256xf32> -> vector<16x256xf32>
    %c0_3 = arith.constant 0 : index
    %c0_4 = arith.constant 0 : index
    %3 = vector.load %arg3[%c0_3, %c0_4] : memref<1x256xf32, #tpu.memory_space<vmem>>, vector<1x256xf32>
    %4 = vector.broadcast %3 : vector<1x256xf32> to vector<16x256xf32>
    %5 = arith.addf %2, %4 : vector<16x256xf32>
    %6 = vector.extract_strided_slice %5 {offsets = [0, 0], sizes = [16, 128], strides = [1, 1]} : vector<16x256xf32> to vector<16x128xf32>
    %7 = vector.extract_strided_slice %5 {offsets = [0, 128], sizes = [16, 128], strides = [1, 1]} : vector<16x256xf32> to vector<16x128xf32>
    %cst_5 = arith.constant 5.000000e-01 : f32
    %8 = vector.broadcast %cst_5 : f32 to vector<16x128xf32>
    %9 = arith.mulf %8, %6 : vector<16x128xf32>
    %cst_6 = arith.constant 0.707106769 : f32
    %10 = vector.broadcast %cst_6 : f32 to vector<16x128xf32>
    %11 = arith.mulf %6, %10 : vector<16x128xf32>
    %12 = math.erf %11 : vector<16x128xf32>
    %cst_7 = arith.constant 1.000000e+00 : f32
    %13 = vector.broadcast %cst_7 : f32 to vector<16x128xf32>
    %14 = arith.addf %13, %12 : vector<16x128xf32>
    %15 = arith.mulf %9, %14 : vector<16x128xf32>
    %16 = arith.mulf %15, %7 : vector<16x128xf32>
    %c0_8 = arith.constant 0 : index
    %c0_9 = arith.constant 0 : index
    %17 = vector.load %arg4[%c0_8, %c0_9] : memref<16x128xf32, #tpu.memory_space<vmem>>, vector<16x128xf32>
    tpu.vector_store %arg4[%c0_8, %c0_9], %16 {strides = array<i32>} : memref<16x128xf32, #tpu.memory_space<vmem>>, vector<16x128xf32>,
    return
  }
  func.func @transform_0(%arg0: i32) -> (i32, i32) {
    %c0_i32 = arith.constant 0 : i32
    %c0_i32_0 = arith.constant 0 : i32
    return %arg0, %c0_i32 : i32, i32
  }
  func.func @transform_1(%arg0: i32) -> (i32, i32) {
    %c0_i32 = arith.constant 0 : i32
    %c0_i32_0 = arith.constant 0 : i32
    %c0_i32_1 = arith.constant 0 : i32
    return %c0_i32, %c0_i32_0 : i32, i32
  }
  func.func @transform_2(%arg0: i32) -> (i32, i32) {
    %c0_i32 = arith.constant 0 : i32
    %c0_i32_0 = arith.constant 0 : i32
    %c0_i32_1 = arith.constant 0 : i32
    return %c0_i32, %c0_i32_0 : i32, i32
  }
  func.func @transform_3(%arg0: i32) -> (i32, i32) {
    %c0_i32 = arith.constant 0 : i32
    %c0_i32_0 = arith.constant 0 : i32
    return %arg0, %c0_i32 : i32, i32
  }
}

</mosaic_0001>

<llo_original>
// kernel: lgmixer_forward.1
$region0: #{lgmixer_forward.1}
  #allocation0 [shape = 'u32[]', space=smem, size = 0x4, offset = 0x4, fixed_abs, tag = 'smem constant byte address 0x4 - core index']
  #allocation1 [shape = 'u32[144,128]{1,0:T(1,128)}', space=vmem, size = 0x12000, scoped, tag = 'internal scratch']
  %s0 = inlined_call_operand.vmem [shape: f32[16,128], index: 0, kind: input, shape index: {}]
  %s1 = inlined_call_operand.vmem [shape: f32[128,256], index: 1, kind: input, shape index: {}]
  %s2 = inlined_call_operand.vmem [shape: f32[1,256], index: 2, kind: input, shape index: {}]
  %s3 = inlined_call_operand.vmem [shape: f32[16,128], index: 3, kind: output, shape index: {}]
  %s4 = sld [smem:[#allocation0]]
  $region22: #{lgmixer_forward.1} parent=0
    _
  %s6 = ssub.s32 1, %s4
  %s7 = scalar_select 0, %s6, %s4
  // Predicated region
  $region2: #{lgmixer_forward.1} parent=0 // pred_check
    _
  $region3: #{lgmixer_forward.1} parent=0 // pred_check_branch
    %9 = sbr.rel (0) target = $region5
  $region4: #{lgmixer_forward.1} parent=0 // pred_region
    _
  $region5: #{lgmixer_forward.1} parent=0 // pred_fallthru
    _
  // Predicated region
  $region6: #{lgmixer_forward.1} parent=0 // pred_check
    _
  $region7: #{lgmixer_forward.1} parent=0 // pred_check_branch
    %11 = sbr.rel (0) target = $region9
  $region8: #{lgmixer_forward.1} parent=0 // pred_region
    _
  $region9: #{lgmixer_forward.1} parent=0 // pred_fallthru
    _
  // Predicated region
  $region10: #{lgmixer_forward.1} parent=0 // pred_check
    _
  $region11: #{lgmixer_forward.1} parent=0 // pred_check_branch
    %13 = sbr.rel (0) target = $region13
  $region12: #{lgmixer_forward.1} parent=0 // pred_region
    _
  $region13: #{lgmixer_forward.1} parent=0 // pred_fallthru
    _
  %v14 = vld [vmem:[%s0] sm:$0xff]
  %v15 = vld [vmem:[%s0 + $0x8] sm:$0xff]
  %v16 = vld [vmem:[%s1] sm:$0xff]
  %v17 = vld [vmem:[%s1 + $0x8] sm:$0xff]
  %v18 = vld [vmem:[%s1 + $0x10] sm:$0xff]
  %v19 = vld [vmem:[%s1 + $0x18] sm:$0xff]
  %v20 = vld [vmem:[%s1 + $0x20] sm:$0xff]
  %v21 = vld [vmem:[%s1 + $0x28] sm:$0xff]
  %v22 = vld [vmem:[%s1 + $0x30] sm:$0xff]
  %v23 = vld [vmem:[%s1 + $0x38] sm:$0xff]
  %v24 = vld [vmem:[%s1 + $0x40] sm:$0xff]
  %v25 = vld [vmem:[%s1 + $0x48] sm:$0xff]
  %v26 = vld [vmem:[%s1 + $0x50] sm:$0xff]
  %v27 = vld [vmem:[%s1 + $0x58] sm:$0xff]
  %v28 = vld [vmem:[%s1 + $0x60] sm:$0xff]
  %v29 = vld [vmem:[%s1 + $0x68] sm:$0xff]
  %v30 = vld [vmem:[%s1 + $0x70] sm:$0xff]
  %v31 = vld [vmem:[%s1 + $0x78] sm:$0xff]
  %v32 = vld [vmem:[%s1 + $0x80] sm:$0xff]
  %v33 = vld [vmem:[%s1 + $0x88] sm:$0xff]
  %v34 = vld [vmem:[%s1 + $0x90] sm:$0xff]
  %v35 = vld [vmem:[%s1 + $0x98] sm:$0xff]
  %v36 = vld [vmem:[%s1 + $0xa0] sm:$0xff]
  %v37 = vld [vmem:[%s1 + $0xa8] sm:$0xff]
  %v38 = vld [vmem:[%s1 + $0xb0] sm:$0xff]
  %v39 = vld [vmem:[%s1 + $0xb8] sm:$0xff]
  %v40 = vld [vmem:[%s1 + $0xc0] sm:$0xff]
  %v41 = vld [vmem:[%s1 + $0xc8] sm:$0xff]
  %v42 = vld [vmem:[%s1 + $0xd0] sm:$0xff]
  %v43 = vld [vmem:[%s1 + $0xd8] sm:$0xff]
  %v44 = vld [vmem:[%s1 + $0xe0] sm:$0xff]
  %v45 = vld [vmem:[%s1 + $0xe8] sm:$0xff]
  %v46 = vld [vmem:[%s1 + $0xf0] sm:$0xff]
  %v47 = vld [vmem:[%s1 + $0xf8] sm:$0xff]
  %v48 = vld [vmem:[%s2] sm:$0x3]
  %v50 = vlaneseq
  %v51 = vshrl.u32 %v50, 7
  %v52 = vsub.s32 0, %v51
  %v53 = vrot.slane %v48, %v52
  %v54 = vlaneseq
  %v55 = vshrl.u32 %v54, 7
  %v56 = vsub.s32 1, %v55
  %v57 = vrot.slane %v48, %v56
  %60 = vmatprep.subr.mxu0 %v17
  %61 = vmatpush1.msra.mxu0 %v16
  %62 = vmatprep.subr.mxu0 %v19
  %63 = vmatpush1.msra.mxu0 %v18
  %64 = vmatprep.subr.mxu0 %v21
  %65 = vmatpush1.msra.mxu0 %v20
  %66 = vmatprep.subr.mxu0 %v23
  %67 = vmatpush1.msra.mxu0 %v22
  %68 = vmatprep.subr.mxu0 %v25
  %69 = vmatpush1.msra.mxu0 %v24
  %70 = vmatprep.subr.mxu0 %v27
  %71 = vmatpush1.msra.mxu0 %v26
  %72 = vmatprep.subr.mxu0 %v29
  %73 = vmatpush1.msra.mxu0 %v28
  %74 = vmatprep.subr.mxu0 %v31
  %75 = vmatpush1.msra.mxu0 %v30
  %76 = vmatprep.subr.mxu0 %v33
  %77 = vmatpush1.msra.mxu0 %v32
  %78 = vmatprep.subr.mxu0 %v35
  %79 = vmatpush1.msra.mxu0 %v34
  %80 = vmatprep.subr.mxu0 %v37
  %81 = vmatpush1.msra.mxu0 %v36
  %82 = vmatprep.subr.mxu0 %v39
  %83 = vmatpush1.msra.mxu0 %v38
  %84 = vmatprep.subr.mxu0 %v41
  %85 = vmatpush1.msra.mxu0 %v40
  %86 = vmatprep.subr.mxu0 %v43
  %87 = vmatpush1.msra.mxu0 %v42
  %88 = vmatprep.subr.mxu0 %v45
  %89 = vmatpush1.msra.mxu0 %v44
  %90 = vmatprep.subr.mxu0 %v47
  %91 = vmatpush1.msra.mxu0 %v46
  %92 = vmatprep.subr.mxu0 0.0
  %93 = vmatpush1.msra.mxu0 0.0
  %94 = vmatprep.subr.mxu0 0.0
  %95 = vmatpush1.msra.mxu0 0.0
  %96 = vmatprep.subr.mxu0 0.0
  %97 = vmatpush1.msra.mxu0 0.0
  %98 = vmatprep.subr.mxu0 0.0
  %99 = vmatpush1.msra.mxu0 0.0
  %100 = vmatprep.subr.mxu0 0.0
  %101 = vmatpush1.msra.mxu0 0.0
  %102 = vmatprep.subr.mxu0 0.0
  %103 = vmatpush1.msra.mxu0 0.0
  %104 = vmatprep.subr.mxu0 0.0
  %105 = vmatpush1.msra.mxu0 0.0
  %106 = vmatprep.subr.mxu0 0.0
  %107 = vmatpush1.msra.mxu0 0.0
  %108 = vmatprep.subr.mxu0 0.0
  %109 = vmatpush1.msra.mxu0 0.0
  %110 = vmatprep.subr.mxu0 0.0
  %111 = vmatpush1.msra.mxu0 0.0
  %112 = vmatprep.subr.mxu0 0.0
  %113 = vmatpush1.msra.mxu0 0.0
  %114 = vmatprep.subr.mxu0 0.0
  %115 = vmatpush1.msra.mxu0 0.0
  %116 = vmatprep.subr.mxu0 0.0
  %117 = vmatpush1.msra.mxu0 0.0
  %118 = vmatprep.subr.mxu0 0.0
  %119 = vmatpush1.msra.mxu0 0.0
  %120 = vmatprep.subr.mxu0 0.0
  %121 = vmatpush1.msra.mxu0 0.0
  %122 = vmatprep.subr.mxu0 0.0
  %123 = vmatpush1.msra.mxu0 0.0
  %124 = vmatprep.mubr.f32.mxu0 0.0
  %125 = vmatmul.mubr.f32.gmra.mrb[0].mxu0 %v14
  %v126 = vpop.f32.mrb[0].mxu0
  %v127 = vadd.f32 %v53, %v126
  %v128 = vpop.f32.mrb[0].mxu0
  %v129 = vadd.f32 %v57, %v128
  %130 = vmatprep.mubr.f32.mxu0 0.0
  %131 = vmatmul.mubr.f32.gmra.mrb[0].mxu0 %v15
  %v132 = vpop.f32.mrb[0].mxu0
  %v133 = vadd.f32 %v53, %v132
  %v134 = vpop.f32.mrb[0].mxu0
  %v135 = vadd.f32 %v57, %v134
  %136 = vdwg.mxu0
  %v137 = vmul.f32 %v127, 0.5
  %v138 = vmul.f32 %v133, 0.5
  %v139 = vmul.f32 %v127, 0.70710677
  %v140 = vmul.f32 %v133, 0.70710677
  %v141 = verf.f32.pop %v139
  %v142 = verf.f32.pop %v140
  %v143 = vadd.f32 %v141, 1.0
  %v144 = vadd.f32 %v142, 1.0
  %v145 = vmul.f32 %v137, %v143
  %v146 = vmul.f32 %v138, %v144
  %v147 = vmul.f32 %v145, %v129
  %v148 = vmul.f32 %v146, %v135
  %149 = vst [vmem:[%s3] sm:$0xff] %v147
  %150 = vst [vmem:[%s3 + $0x8] sm:$0xff] %v148
  // Predicated region
  $region14: #{lgmixer_forward.1} parent=0 // pred_check
    _
  $region15: #{lgmixer_forward.1} parent=0 // pred_check_branch
    %152 = sbr.rel (0) target = $region17
  $region16: #{lgmixer_forward.1} parent=0 // pred_region
    _
  $region17: #{lgmixer_forward.1} parent=0 // pred_fallthru
    _
  // Predicated region
  $region18: #{lgmixer_forward.1} parent=0 // pred_check
    _
  $region19: #{lgmixer_forward.1} parent=0 // pred_check_branch
    %154 = sbr.rel (0) target = $region21
  $region20: #{lgmixer_forward.1} parent=0 // pred_region
    _
  $region21: #{lgmixer_forward.1} parent=0 // pred_fallthru
    _

</llo_original>
